<compile_context>
chip_gen: v7x
topology: tpu7x:2x2x1
jax: 0.10.0
libtpu: 0.0.40
codegen_flags: <defaults>
</compile_context>

<pallas_src>
import math

import jax
import jax.numpy as jnp
from jax.experimental import pallas as pl
from jax.experimental.pallas import tpu as pltpu

_EPS = 1e-5


def _upsample_block_kernel(x_ref, w_ref, b_ref, scale_ref, shift_ref, o_ref):
    # x_ref: (C, TL) compute dtype; w_ref: (2C, C); b/scale/shift: (2C, 1) f32;
    # o_ref: (2C, TL) f32.
    # Folded 1x1 conv (+ implicit channel upsample) on the MXU, f32 accumulate.
    y = jnp.dot(w_ref[...], x_ref[...], preferred_element_type=jnp.float32)
    y = jnp.maximum(y + b_ref[...], 0.0)            # conv bias + ReLU (VPU)
    # Dropout: identity (eval).  BatchNorm (eval): precomputed per-channel affine.
    o_ref[...] = (y * scale_ref[...] + shift_ref[...]).astype(o_ref.dtype)


def _choose_tl(L, C, in_itemsize):
    """Pick a lane-dense length tile that keeps double-buffered tiles small."""
    budget = 8 * 1024 * 1024  # bytes for the length-tiled operands (per step)
    for tl in (2048, 1024, 512, 256, 128):
        tile_bytes = 2 * (C * tl * in_itemsize) + 2 * (2 * C * tl * 4)
        if L % tl == 0 and tile_bytes <= budget:
            return tl
    # Full-extent block is always a legal BlockSpec (handles small / odd L).
    return L


def upsample_block(x, w, b, gamma, beta, running_mean, running_var,
                   *, compute_dtype=None):
    """Eval-mode UpsampleBlock forward.

    x: (N, C, L); w: (2C, 2C) Conv1d(kernel_size=1) weight (kernel dim squeezed);
    b, gamma, beta, running_mean, running_var: (2C,)
    Returns (N, 2C, L) float32.
    """
    N, C, L = x.shape
    C2 = 2 * C
    if compute_dtype is None:
        compute_dtype = x.dtype
    compute_dtype = jnp.dtype(compute_dtype)

    # Fold the nearest-neighbour channel upsample into the conv weight:
    #   y[o] = sum_k w[o,k] * x_up[k] = sum_c (w[o,2c] + w[o,2c+1]) * x[c]
    w32 = w.astype(jnp.float32)
    w_fold = (w32[:, 0::2] + w32[:, 1::2]).astype(compute_dtype)     # (2C, C)

    # Hoist the grid-invariant BatchNorm(eval) affine out of the kernel.
    scale = (gamma.astype(jnp.float32)
             * jax.lax.rsqrt(running_var.astype(jnp.float32) + _EPS))
    shift = beta.astype(jnp.float32) - running_mean.astype(jnp.float32) * scale

    col = lambda v: v.reshape(C2, 1).astype(jnp.float32)
    x_c = x.astype(compute_dtype)

    TL = _choose_tl(L, C, compute_dtype.itemsize)
    grid = (N, L // TL)

    w_spec = pl.BlockSpec((C2, C), lambda n, l: (0, 0))      # resident each step
    col_spec = pl.BlockSpec((C2, 1), lambda n, l: (0, 0))

    return pl.pallas_call(
        _upsample_block_kernel,
        out_shape=jax.ShapeDtypeStruct((N, C2, L), jnp.float32),
        grid=grid,
        in_specs=[
            pl.BlockSpec((None, C, TL), lambda n, l: (n, 0, l)),   # x tile
            w_spec,     # folded conv weight
            col_spec,   # conv bias
            col_spec,   # bn scale
            col_spec,   # bn shift
        ],
        out_specs=pl.BlockSpec((None, C2, TL), lambda n, l: (n, 0, l)),
        compiler_params=pltpu.CompilerParams(
            dimension_semantics=("parallel", "parallel"),
            vmem_limit_bytes=32 * 1024 * 1024,
        ),
    )(x_c, w_fold, col(b), col(scale), col(shift))


if __name__ == "__main__":
    key = jax.random.PRNGKey(0)
    N, d_in, L = 2, 4, 16
    d_out = 2 * d_in
    ks = jax.random.split(key, 7)

    x = jax.random.normal(ks[0], (N, d_in, L), dtype=jnp.float32)

    # Deterministic synthetic parameters (shapes as in the module's __init__):
    # Conv1d(d_out, d_out, kernel_size=1): weight (d_out, d_out, 1) -> (d_out, d_out)
    bound = 1.0 / math.sqrt(d_out)
    w = jax.random.uniform(ks[1], (d_out, d_out), jnp.float32, -bound, bound)
    b = jax.random.uniform(ks[2], (d_out,), jnp.float32, -bound, bound)
    # BatchNorm1d(d_out) params / running stats (non-trivial values).
    gamma = jax.random.uniform(ks[3], (d_out,), jnp.float32, 0.5, 1.5)
    beta = 0.1 * jax.random.normal(ks[4], (d_out,), jnp.float32)
    running_mean = 0.1 * jax.random.normal(ks[5], (d_out,), jnp.float32)
    running_var = jax.random.uniform(ks[6], (d_out,), jnp.float32, 0.5, 1.5)

    # Pure-JAX eval-mode reference (materialized channel-upsample).
    x_up = jnp.repeat(x, 2, axis=1)
    y = jnp.einsum("oc,ncl->nol", w, x_up) + b[None, :, None]
    y = jnp.maximum(y, 0.0)
    scale_ref_ = gamma / jnp.sqrt(running_var + _EPS)
    shift_ref_ = beta - running_mean * scale_ref_
    ref = y * scale_ref_[None, :, None] + shift_ref_[None, :, None]

    # f32 compute (tight check).
    out_f32 = jax.block_until_ready(
        upsample_block(x, w, b, gamma, beta, running_mean, running_var,
                       compute_dtype=jnp.float32))
    assert out_f32.shape == (N, d_out, L)
    err_f32 = float(jnp.max(jnp.abs(out_f32 - ref)))
    assert jnp.allclose(out_f32, ref, atol=1e-4, rtol=1e-4), err_f32

    # bf16 inputs/weight (halves streamed HBM bytes on v6e/v7x), f32 accumulation.
    out_bf16 = jax.block_until_ready(
        upsample_block(x, w, b, gamma, beta, running_mean, running_var,
                       compute_dtype=jnp.bfloat16))
    err_bf16 = float(jnp.max(jnp.abs(out_bf16 - ref)))
    assert jnp.allclose(out_bf16, ref, atol=8e-2, rtol=8e-2), err_bf16

    print("KERNEL_OK")
</pallas_src>

<mosaic_0001>
module attributes {stable_mosaic.version = 11 : i64} {
  func.func @_upsample_block_kernel(%arg0: i32, %arg1: i32, %arg2: memref<1x4x16xf32, #tpu.memory_space<vmem>>, %arg3: memref<8x4xf32, #tpu.memory_space<vmem>>, %arg4: memref<8x1xf32, #tpu.memory_space<vmem>>, %arg5: memref<8x1xf32, #tpu.memory_space<vmem>>, %arg6: memref<8x1xf32, #tpu.memory_space<vmem>>, %arg7: memref<1x8x16xf32, #tpu.memory_space<vmem>>) attributes {dimension_semantics = [#tpu.dimension_semantics<parallel>, #tpu.dimension_semantics<parallel>], iteration_bounds = array<i64: 2, 1>, scalar_prefetch = 0 : i64, scratch_operands = 0 : i64, tpu.core_type = #tpu.core_type<tc>, window_params = [{transform_indices = @transform_0, window_bounds = array<i64: 1, 4, 16>}, {pipeline_mode = #tpu.pipeline_mode<synchronous>, transform_indices = @transform_1, window_bounds = array<i64: 8, 4>}, {pipeline_mode = #tpu.pipeline_mode<synchronous>, transform_indices = @transform_2, window_bounds = array<i64: 8, 1>}, {pipeline_mode = #tpu.pipeline_mode<synchronous>, transform_indices = @transform_3, window_bounds = array<i64: 8, 1>}, {pipeline_mode = #tpu.pipeline_mode<synchronous>, transform_indices = @transform_4, window_bounds = array<i64: 8, 1>}, {transform_indices = @transform_5, window_bounds = array<i64: 1, 8, 16>}]} {
    %c0 = arith.constant 0 : index
    %c0_0 = arith.constant 0 : index
    %0 = vector.load %arg3[%c0, %c0_0] : memref<8x4xf32, #tpu.memory_space<vmem>>, vector<8x4xf32>
    %c0_1 = arith.constant 0 : index
    %c0_2 = arith.constant 0 : index
    %c0_3 = arith.constant 0 : index
    %1 = vector.load %arg2[%c0_1, %c0_2, %c0_3] : memref<1x4x16xf32, #tpu.memory_space<vmem>>, vector<1x4x16xf32>
    %2 = vector.shape_cast %1 : vector<1x4x16xf32> to vector<4x16xf32>
    %cst = arith.constant dense<0.000000e+00> : vector<8x16xf32>
    %3 = tpu.matmul %0, %2, %cst {dimension_numbers = #tpu.dot_dimension_numbers<[1], [0], [0], [1], [0, 0, 1, 1], [], []>} : vector<8x4xf32>, vector<4x16xf32>, vector<8x16xf32> -> vector<8x16xf32>
    %c0_4 = arith.constant 0 : index
    %c0_5 = arith.constant 0 : index
    %4 = vector.load %arg4[%c0_4, %c0_5] : memref<8x1xf32, #tpu.memory_space<vmem>>, vector<8x1xf32>
    %5 = vector.broadcast %4 : vector<8x1xf32> to vector<8x16xf32>
    %6 = arith.addf %3, %5 : vector<8x16xf32>
    %cst_6 = arith.constant 0.000000e+00 : f32
    %7 = vector.broadcast %cst_6 : f32 to vector<8x16xf32>
    %8 = arith.maximumf %6, %7 : vector<8x16xf32>
    %c0_7 = arith.constant 0 : index
    %c0_8 = arith.constant 0 : index
    %9 = vector.load %arg5[%c0_7, %c0_8] : memref<8x1xf32, #tpu.memory_space<vmem>>, vector<8x1xf32>
    %10 = vector.broadcast %9 : vector<8x1xf32> to vector<8x16xf32>
    %11 = arith.mulf %8, %10 : vector<8x16xf32>
    %c0_9 = arith.constant 0 : index
    %c0_10 = arith.constant 0 : index
    %12 = vector.load %arg6[%c0_9, %c0_10] : memref<8x1xf32, #tpu.memory_space<vmem>>, vector<8x1xf32>
    %13 = vector.broadcast %12 : vector<8x1xf32> to vector<8x16xf32>
    %14 = arith.addf %11, %13 : vector<8x16xf32>
    %c0_11 = arith.constant 0 : index
    %c0_12 = arith.constant 0 : index
    %c0_13 = arith.constant 0 : index
    %15 = vector.load %arg7[%c0_11, %c0_12, %c0_13] : memref<1x8x16xf32, #tpu.memory_space<vmem>>, vector<1x8x16xf32>
    %16 = vector.shape_cast %15 : vector<1x8x16xf32> to vector<8x16xf32>
    %17 = vector.shape_cast %14 : vector<8x16xf32> to vector<1x8x16xf32>
    tpu.vector_store %arg7[%c0_11, %c0_12, %c0_13], %17 {strides = array<i32>} : memref<1x8x16xf32, #tpu.memory_space<vmem>>, vector<1x8x16xf32>,
    return
  }
  func.func @transform_0(%arg0: i32, %arg1: i32) -> (i32, i32, i32) {
    %c0_i32 = arith.constant 0 : i32
    %c0_i32_0 = arith.constant 0 : i32
    return %arg0, %c0_i32, %arg1 : i32, i32, i32
  }
  func.func @transform_1(%arg0: i32, %arg1: i32) -> (i32, i32) {
    %c0_i32 = arith.constant 0 : i32
    %c0_i32_0 = arith.constant 0 : i32
    %c0_i32_1 = arith.constant 0 : i32
    return %c0_i32, %c0_i32_0 : i32, i32
  }
  func.func @transform_2(%arg0: i32, %arg1: i32) -> (i32, i32) {
    %c0_i32 = arith.constant 0 : i32
    %c0_i32_0 = arith.constant 0 : i32
    %c0_i32_1 = arith.constant 0 : i32
    return %c0_i32, %c0_i32_0 : i32, i32
  }
  func.func @transform_3(%arg0: i32, %arg1: i32) -> (i32, i32) {
    %c0_i32 = arith.constant 0 : i32
    %c0_i32_0 = arith.constant 0 : i32
    %c0_i32_1 = arith.constant 0 : i32
    return %c0_i32, %c0_i32_0 : i32, i32
  }
  func.func @transform_4(%arg0: i32, %arg1: i32) -> (i32, i32) {
    %c0_i32 = arith.constant 0 : i32
    %c0_i32_0 = arith.constant 0 : i32
    %c0_i32_1 = arith.constant 0 : i32
    return %c0_i32, %c0_i32_0 : i32, i32
  }
  func.func @transform_5(%arg0: i32, %arg1: i32) -> (i32, i32, i32) {
    %c0_i32 = arith.constant 0 : i32
    %c0_i32_0 = arith.constant 0 : i32
    return %arg0, %c0_i32, %arg1 : i32, i32, i32
  }
}

</mosaic_0001>

<llo_original>
// kernel: tpu_custom_call.1
$region0: #{tpu_custom_call.1}
  #allocation0 [shape = 'u32[]', space=smem, size = 0x4, offset = 0x4, fixed_abs, tag = 'smem constant byte address 0x4 - core index']
  #allocation1 [shape = 'u32[144,128]{1,0:T(1,128)}', space=vmem, size = 0x12000, scoped, tag = 'internal scratch']
  %s0 = inlined_call_operand.vmem [shape: f32[2,4,16], index: 0, kind: input, shape index: {}]
  %s1 = inlined_call_operand.vmem [shape: f32[8,4], index: 1, kind: input, shape index: {}]
  %s2 = inlined_call_operand.vmem [shape: f32[8,1], index: 2, kind: input, shape index: {}]
  %s3 = inlined_call_operand.vmem [shape: f32[8,1], index: 3, kind: input, shape index: {}]
  %s4 = inlined_call_operand.vmem [shape: f32[8,1], index: 4, kind: input, shape index: {}]
  %s5 = inlined_call_operand.hbm [shape: f32[2,8,16], index: 5, kind: output, shape index: {}]
  %s6 = sld [smem:[#allocation0]]
  $region53: #{tpu_custom_call.1} parent=0
    _
  %s8 = ssub.s32 1, %s6
  %s9 = scalar_select 0, %s8, %s6
  $region1: #{tpu_custom_call.1} parent=0
    #allocation2 [shape = 'u8[8192]{0}', space=vmem, size = 0x2000, scoped, tag = 'output window, operand 0']
    #allocation3 [shape = 's32[2]{0}', space=sflag, size = 0x8, scoped, tag = 'scoped memory for tpu_custom_call.1']
    %10 = vsyncpa [#allocation3], 0
    %s11 = scalar_lea.sflag [#allocation3], 1
    %12 = vsyncpa %s11, 0
    loop: start=0, step=1, limit=4
    $region2: #{tpu_custom_call.1} parent=1 // loop_pre_header
      _
    $region3: #{tpu_custom_call.1} parent=1 // loop_header
      %s14 = sphi 0, %s18
      %p15 = scmp.ge.s32.totalorder %s14, 4
      %s21 = sphi 0, %s33
      %s22 = sphi 0, %s29
      %s23 = sphi 0, %s21
      %s24 = sphi 0, %s22
      %s25 = sphi 0, %s23
      %s26 = sphi 0, %s24
      %s38 = sphi 0, %s40
      %s41 = sphi 0, %s38
      %s42 = sphi 0, %s41
      %s58 = sphi 0, %s42
      %s62 = sphi 0, %s62
      %s64 = sphi 0, %s62
      %s65 = sphi 0, %s64
      %s79 = sphi 0, %s65
      %s83 = sphi 0, %s83
      %s85 = sphi 0, %s83
      %s86 = sphi 0, %s85
      %s100 = sphi 0, %s86
      %s104 = sphi 0, %s104
      %s106 = sphi 0, %s104
      %s107 = sphi 0, %s106
      %s121 = sphi 0, %s107
      %s125 = sphi 0, %s125
      %s127 = sphi 0, %s125
      %s128 = sphi 0, %s127
      %s142 = sphi 0, %s128
      %s150 = sphi 0, %s152
      %s153 = sphi 0, %s150
      %s154 = sphi 0, %s153
      %s170 = sphi 0, %s154
    $region4: #{tpu_custom_call.1} parent=1 // loop_header_branch
      %17 = sbr.rel (%p15) target = $region8
    $region5: #{tpu_custom_call.1} parent=1 // loop_body
      %s19 = ssub.s32 %s14, 1
      %s20 = ssub.s32 %s14, 2
      %s27 = sadd.s32 1, %s22
      %p28 = scmp.ge.s32.totalorder %s27, 1
      %s29 = scalar_select %p28, 0, %s27
      %s30 = sadd.s32 1, %s21
      %s31 = scalar_select %p28, %s30, %s21
      %p32 = scmp.ge.s32.totalorder %s31, 2
      %s33 = scalar_select %p32, 0, %s31
      %s34 = ssub.s32 %s21, %s33
      %s35 = ssub.s32 %s22, %s29
      %s36 = sor.u32 %s34, %s35
      %p37 = scmp.eq.s32.totalorder %s36, 0
      %s39 = sadd.s32 %s38, 1
      %s40 = scalar_select %p37, %s38, %s39
      %p43 = pneg %p37
      %p44 = scmp.eq.s32.totalorder %s14, 1
      %p45 = por %p43, %p44
      %p46 = scmp.ne.s32.totalorder %s38, %s41
      %p47 = scmp.eq.s32.totalorder %s14, 0
      %p48 = por %p46, %p47
      %p49 = scmp.ne.s32.totalorder %s38, %s41
      %p50 = scmp.eq.s32.totalorder %s19, 1
      %p51 = por %p49, %p50
      %p52 = scmp.ne.s32.totalorder %s41, %s42
      %p53 = scmp.eq.s32.totalorder %s19, 0
      %p54 = por %p52, %p53
      %p55 = scmp.ne.s32.totalorder %s41, %s42
      %p56 = scmp.eq.s32.totalorder %s20, 1
      %p57 = por %p55, %p56
      %p59 = scmp.ne.s32.totalorder %s42, %s58
      %p60 = scmp.eq.s32.totalorder %s20, 0
      %p61 = por %p59, %p60
      %s63 = sadd.s32 %s62, 1
      %p66 = scmp.eq.s32.totalorder %s14, 1
      %p67 = scmp.ne.s32.totalorder %s62, %s64
      %p68 = scmp.eq.s32.totalorder %s14, 0
      %p69 = por %p67, %p68
      %p70 = scmp.ne.s32.totalorder %s62, %s64
      %p71 = scmp.eq.s32.totalorder %s19, 1
      %p72 = por %p70, %p71
      %p73 = scmp.ne.s32.totalorder %s64, %s65
      %p74 = scmp.eq.s32.totalorder %s19, 0
      %p75 = por %p73, %p74
      %p76 = scmp.ne.s32.totalorder %s64, %s65
      %p77 = scmp.eq.s32.totalorder %s20, 1
      %p78 = por %p76, %p77
      %p80 = scmp.ne.s32.totalorder %s65, %s79
      %p81 = scmp.eq.s32.totalorder %s20, 0
      %p82 = por %p80, %p81
      %s84 = sadd.s32 %s83, 1
      %p87 = scmp.eq.s32.totalorder %s14, 1
      %p88 = scmp.ne.s32.totalorder %s83, %s85
      %p89 = scmp.eq.s32.totalorder %s14, 0
      %p90 = por %p88, %p89
      %p91 = scmp.ne.s32.totalorder %s83, %s85
      %p92 = scmp.eq.s32.totalorder %s19, 1
      %p93 = por %p91, %p92
      %p94 = scmp.ne.s32.totalorder %s85, %s86
      %p95 = scmp.eq.s32.totalorder %s19, 0
      %p96 = por %p94, %p95
      %p97 = scmp.ne.s32.totalorder %s85, %s86
      %p98 = scmp.eq.s32.totalorder %s20, 1
      %p99 = por %p97, %p98
      %p101 = scmp.ne.s32.totalorder %s86, %s100
      %p102 = scmp.eq.s32.totalorder %s20, 0
      %p103 = por %p101, %p102
      %s105 = sadd.s32 %s104, 1
      %p108 = scmp.eq.s32.totalorder %s14, 1
      %p109 = scmp.ne.s32.totalorder %s104, %s106
      %p110 = scmp.eq.s32.totalorder %s14, 0
      %p111 = por %p109, %p110
      %p112 = scmp.ne.s32.totalorder %s104, %s106
      %p113 = scmp.eq.s32.totalorder %s19, 1
      %p114 = por %p112, %p113
      %p115 = scmp.ne.s32.totalorder %s106, %s107
      %p116 = scmp.eq.s32.totalorder %s19, 0
      %p117 = por %p115, %p116
      %p118 = scmp.ne.s32.totalorder %s106, %s107
      %p119 = scmp.eq.s32.totalorder %s20, 1
      %p120 = por %p118, %p119
      %p122 = scmp.ne.s32.totalorder %s107, %s121
      %p123 = scmp.eq.s32.totalorder %s20, 0
      %p124 = por %p122, %p123
      %s126 = sadd.s32 %s125, 1
      %p129 = scmp.eq.s32.totalorder %s14, 1
      %p130 = scmp.ne.s32.totalorder %s125, %s127
      %p131 = scmp.eq.s32.totalorder %s14, 0
      %p132 = por %p130, %p131
      %p133 = scmp.ne.s32.totalorder %s125, %s127
      %p134 = scmp.eq.s32.totalorder %s19, 1
      %p135 = por %p133, %p134
      %p136 = scmp.ne.s32.totalorder %s127, %s128
      %p137 = scmp.eq.s32.totalorder %s19, 0
      %p138 = por %p136, %p137
      %p139 = scmp.ne.s32.totalorder %s127, %s128
      %p140 = scmp.eq.s32.totalorder %s20, 1
      %p141 = por %p139, %p140
      %p143 = scmp.ne.s32.totalorder %s128, %s142
      %p144 = scmp.eq.s32.totalorder %s20, 0
      %p145 = por %p143, %p144
      %s146 = ssub.s32 %s21, %s33
      %s147 = ssub.s32 %s22, %s29
      %s148 = sor.u32 %s146, %s147
      %p149 = scmp.eq.s32.totalorder %s148, 0
      %s151 = sadd.s32 %s150, 1
      %s152 = scalar_select %p149, %s150, %s151
      %p155 = pneg %p149
      %p156 = scmp.eq.s32.totalorder %s14, 1
      %p157 = por %p155, %p156
      %p158 = scmp.ne.s32.totalorder %s150, %s153
      %p159 = scmp.eq.s32.totalorder %s14, 0
      %p160 = por %p158, %p159
      %p161 = scmp.ne.s32.totalorder %s150, %s153
      %p162 = scmp.eq.s32.totalorder %s19, 1
      %p163 = por %p161, %p162
      %p164 = scmp.ne.s32.totalorder %s153, %s154
      %p165 = scmp.eq.s32.totalorder %s19, 0
      %p166 = por %p164, %p165
      %p167 = scmp.ne.s32.totalorder %s153, %s154
      %p168 = scmp.eq.s32.totalorder %s20, 1
      %p169 = por %p167, %p168
      %p171 = scmp.ne.s32.totalorder %s154, %s170
      %p172 = scmp.eq.s32.totalorder %s20, 0
      %p173 = por %p171, %p172
      %p174 = scmp.le.s32.totalorder 1, %s14
      %p175 = scmp.lt.s32.totalorder %s14, 3
      %p176 = pnand %p174, %p175
      %p177 = pneg %p176
      // Predicated region
      $region9: #{tpu_custom_call.1} parent=5 // pred_check
        _
      $region10: #{tpu_custom_call.1} parent=5 // pred_check_branch
        %179 = sbr.rel (%p176) target = $region12
      $region11: #{tpu_custom_call.1} parent=5 // pred_region
        %s180 = ssub.s32 %s14, 1
        // Predicated region
        $region13: #{tpu_custom_call.1} parent=11 // pred_check
          %p181 = pneg %p75
        $region14: #{tpu_custom_call.1} parent=11 // pred_check_branch
          %183 = sbr.rel (%p181) target = $region16
        $region15: #{tpu_custom_call.1} parent=11 // pred_region
          _
        $region16: #{tpu_custom_call.1} parent=11 // pred_fallthru
          _
        // Predicated region
        $region17: #{tpu_custom_call.1} parent=11 // pred_check
          %p184 = pneg %p96
        $region18: #{tpu_custom_call.1} parent=11 // pred_check_branch
          %186 = sbr.rel (%p184) target = $region20
        $region19: #{tpu_custom_call.1} parent=11 // pred_region
          _
        $region20: #{tpu_custom_call.1} parent=11 // pred_fallthru
          _
        // Predicated region
        $region21: #{tpu_custom_call.1} parent=11 // pred_check
          %p187 = pneg %p117
        $region22: #{tpu_custom_call.1} parent=11 // pred_check_branch
          %189 = sbr.rel (%p187) target = $region24
        $region23: #{tpu_custom_call.1} parent=11 // pred_region
          _
        $region24: #{tpu_custom_call.1} parent=11 // pred_fallthru
          _
        // Predicated region
        $region25: #{tpu_custom_call.1} parent=11 // pred_check
          %p190 = pneg %p138
        $region26: #{tpu_custom_call.1} parent=11 // pred_check_branch
          %192 = sbr.rel (%p190) target = $region28
        $region27: #{tpu_custom_call.1} parent=11 // pred_region
          _
        $region28: #{tpu_custom_call.1} parent=11 // pred_fallthru
          _
      $region12: #{tpu_custom_call.1} parent=5 // pred_fallthru
        _
      %p193 = scmp.lt.s32.totalorder %s14, 2
      // Predicated region
      $region29: #{tpu_custom_call.1} parent=5 // pred_check
        %p194 = pneg %p193
      $region30: #{tpu_custom_call.1} parent=5 // pred_check_branch
        %196 = sbr.rel (%p194) target = $region32
      $region31: #{tpu_custom_call.1} parent=5 // pred_region
        // Predicated region
        $region33: #{tpu_custom_call.1} parent=31 // pred_check
          %p197 = pneg %p48
        $region34: #{tpu_custom_call.1} parent=31 // pred_check_branch
          %199 = sbr.rel (%p197) target = $region36
        $region35: #{tpu_custom_call.1} parent=31 // pred_region
          %p200 = scmp.lt.s32.totalorder %s21, 1
          %s201 = scalar_select %p200, %s21, 1
          %p202 = scmp.lt.s32.totalorder %s22, 0
          %s203 = scalar_select %p202, %s22, 0
          %s204 = sadd.s32 %s203, %s201
          %s205 = smul.addr %s204, 4
          %s206 = scalar_lea.vmem %s0, %s205
        $region36: #{tpu_custom_call.1} parent=31 // pred_fallthru
          _
      $region32: #{tpu_custom_call.1} parent=5 // pred_fallthru
        _
      %p207 = scmp.le.s32.totalorder 1, %s14
      %p208 = scmp.lt.s32.totalorder %s14, 3
      %p209 = pnand %p207, %p208
      %p210 = pneg %p209
      // Predicated region
      $region37: #{tpu_custom_call.1} parent=5 // pred_check
        _
      $region38: #{tpu_custom_call.1} parent=5 // pred_check_branch
        %212 = sbr.rel (%p209) target = $region40
      $region39: #{tpu_custom_call.1} parent=5 // pred_region
        %s213 = ssub.s32 %s14, 1
        %p214 = scmp.lt.s32.totalorder %s23, 1
        %s215 = scalar_select %p214, %s23, 1
        %p216 = scmp.lt.s32.totalorder %s24, 0
        %s217 = scalar_select %p216, %s24, 0
        %s218 = sadd.s32 %s217, %s215
        %s219 = smul.addr %s218, 4
        %s220 = scalar_lea.vmem %s0, %s219
        %p221 = pneg %p54
        %p222 = pneg %p51
        %p223 = pneg %p75
        %p224 = pneg %p72
        %p225 = pneg %p96
        %p226 = pneg %p93
        %p227 = pneg %p117
        %p228 = pneg %p114
        %p229 = pneg %p138
        %p230 = pneg %p135
        %p231 = pneg %p166
        %p232 = pneg %p163
        %s233 = sand.u32 %s153, 1
        %s234 = scalar_lea.sflag [#allocation3], %s233
        %s235 = sand.u32 %s153, 1
        %s236 = smul.addr %s235, 8
        %s237 = scalar_lea.vmem [#allocation2], %s236
        %p238 = scmp.lt.s32.totalorder %s23, 1
        %s239 = scalar_select %p238, %s23, 1
        %p240 = scmp.lt.s32.totalorder %s24, 0
        %s241 = scalar_select %p240, %s24, 0
        %s242 = sadd.s32 %s241, %s239
        %s243 = smul.addr %s242, 4
        %s244 = scalar_lea.vmem %s0, %s243
        %v245 = vld [vmem:[%s1] sm:$0xff]
        %v246 = vld [vmem:[%s244] sm:$0xf]
        %v247 = vld [vmem:[%s2] sm:$0xff]
        %249 = vset.pattern.permute.xlu0 0
        %250 = vperm.xlu0 %249, %v247
        %v251 = vpop.permute.xlu0 %250
        %vm253 = vcmask 31744
        %v255 = vsel %vm253, %v245, 0
        %vm257 = vcmask 1043456
        %v259 = vsel %vm257, %v246, 0
        %261 = vmatprep.subr.mxu0 0.0
        %262 = vmatpush1.msra.mxu0 %v259
        %263 = vmatprep.subr.mxu0 0.0
        %264 = vmatpush1.msra.mxu0 0.0
        %265 = vmatprep.subr.mxu0 0.0
        %266 = vmatpush1.msra.mxu0 0.0
        %267 = vmatprep.subr.mxu0 0.0
        %268 = vmatpush1.msra.mxu0 0.0
        %269 = vmatprep.subr.mxu0 0.0
        %270 = vmatpush1.msra.mxu0 0.0
        %271 = vmatprep.subr.mxu0 0.0
        %272 = vmatpush1.msra.mxu0 0.0
        %273 = vmatprep.subr.mxu0 0.0
        %274 = vmatpush1.msra.mxu0 0.0
        %275 = vmatprep.subr.mxu0 0.0
        %276 = vmatpush1.msra.mxu0 0.0
        %277 = vmatprep.subr.mxu0 0.0
        %278 = vmatpush1.msra.mxu0 0.0
        %279 = vmatprep.subr.mxu0 0.0
        %280 = vmatpush1.msra.mxu0 0.0
        %281 = vmatprep.subr.mxu0 0.0
        %282 = vmatpush1.msra.mxu0 0.0
        %283 = vmatprep.subr.mxu0 0.0
        %284 = vmatpush1.msra.mxu0 0.0
        %285 = vmatprep.subr.mxu0 0.0
        %286 = vmatpush1.msra.mxu0 0.0
        %287 = vmatprep.subr.mxu0 0.0
        %288 = vmatpush1.msra.mxu0 0.0
        %289 = vmatprep.subr.mxu0 0.0
        %290 = vmatpush1.msra.mxu0 0.0
        %291 = vmatprep.subr.mxu0 0.0
        %292 = vmatpush1.msra.mxu0 0.0
        %293 = vmatprep.subr.mxu0 0.0
        %294 = vmatpush1.msra.mxu0 0.0
        %295 = vmatprep.subr.mxu0 0.0
        %296 = vmatpush1.msra.mxu0 0.0
        %297 = vmatprep.subr.mxu0 0.0
        %298 = vmatpush1.msra.mxu0 0.0
        %299 = vmatprep.subr.mxu0 0.0
        %300 = vmatpush1.msra.mxu0 0.0
        %301 = vmatprep.subr.mxu0 0.0
        %302 = vmatpush1.msra.mxu0 0.0
        %303 = vmatprep.subr.mxu0 0.0
        %304 = vmatpush1.msra.mxu0 0.0
        %305 = vmatprep.subr.mxu0 0.0
        %306 = vmatpush1.msra.mxu0 0.0
        %307 = vmatprep.subr.mxu0 0.0
        %308 = vmatpush1.msra.mxu0 0.0
        %309 = vmatprep.subr.mxu0 0.0
        %310 = vmatpush1.msra.mxu0 0.0
        %311 = vmatprep.subr.mxu0 0.0
        %312 = vmatpush1.msra.mxu0 0.0
        %313 = vmatprep.subr.mxu0 0.0
        %314 = vmatpush1.msra.mxu0 0.0
        %315 = vmatprep.subr.mxu0 0.0
        %316 = vmatpush1.msra.mxu0 0.0
        %317 = vmatprep.subr.mxu0 0.0
        %318 = vmatpush1.msra.mxu0 0.0
        %319 = vmatprep.subr.mxu0 0.0
        %320 = vmatpush1.msra.mxu0 0.0
        %321 = vmatprep.subr.mxu0 0.0
        %322 = vmatpush1.msra.mxu0 0.0
        %323 = vmatprep.subr.mxu0 0.0
        %324 = vmatpush1.msra.mxu0 0.0
        %325 = vmatprep.mubr.f32.mxu0 0.0
        %326 = vmatmul.mubr.f32.gmra.mrb[0].mxu0 %v255
        %v327 = vpop.f32.mrb[0].mxu0
        %v328 = vadd.f32 %v251, %v327
        %v329 = vpop.f32.mrb[0].mxu0
        %330 = vdwg.mxu0
        %v331 = vmax.f32 %v328, 0.0
        %v332 = vld [vmem:[%s3] sm:$0xff]
        %334 = vset.pattern.permute.xlu0 0
        %335 = vperm.xlu0 %334, %v332
        %v336 = vpop.permute.xlu0 %335
        %v338 = vmul.f32 %v331, %v336
        %v339 = vld [vmem:[%s4] sm:$0xff]
        %341 = vset.pattern.permute.xlu0 0
        %342 = vperm.xlu0 %341, %v339
        %v343 = vpop.permute.xlu0 %342
        %v345 = vadd.f32 %v338, %v343
        %vm346 = vcmask 130048
        %347 = vst.msk [vmem:[%s237] sm:$0xff] %vm346, %v345
        %s348 = sand.u32 %s153, 1
        %s349 = scalar_lea.sflag [#allocation3], %s348
        %s350 = sand.u32 %s153, 1
        %s351 = smul.addr %s350, 8
        %s352 = scalar_lea.vmem [#allocation2], %s351
        // Predicated region
        $region41: #{tpu_custom_call.1} parent=39 // pred_check
          %p353 = pneg %p163
        $region42: #{tpu_custom_call.1} parent=39 // pred_check_branch
          %355 = sbr.rel (%p353) target = $region44
        $region43: #{tpu_custom_call.1} parent=39 // pred_region
          %s357 = ssub.s32 128, 128
          %358 = vsyncadd %s349, %s357
          %s359 = sadd.s32 %s24, %s23
          %s360 = smul.addr %s359, 128
          %s361 = scalar_lea.hbm %s5, %s360
          %s363 = sshll.u32 %s352, 4
          %s364 = int_to_ptr.vmem [resolvable:$true] %s363
          %366 = dma.vmem_to_hbm [thread:$0]  %s364, 128, %s361, %s349
        $region44: #{tpu_custom_call.1} parent=39 // pred_fallthru
          _
      $region40: #{tpu_custom_call.1} parent=5 // pred_fallthru
        _
      %p367 = scmp.le.s32.totalorder 2, %s14
      // Predicated region
      $region45: #{tpu_custom_call.1} parent=5 // pred_check
        %p368 = pneg %p367
      $region46: #{tpu_custom_call.1} parent=5 // pred_check_branch
        %370 = sbr.rel (%p368) target = $region48
      $region47: #{tpu_custom_call.1} parent=5 // pred_region
        %s371 = ssub.s32 %s14, 2
        // Predicated region
        $region49: #{tpu_custom_call.1} parent=47 // pred_check
          %p372 = pneg %p169
        $region50: #{tpu_custom_call.1} parent=47 // pred_check_branch
          %374 = sbr.rel (%p372) target = $region52
        $region51: #{tpu_custom_call.1} parent=47 // pred_region
          %s375 = sand.u32 %s154, 1
          %s376 = scalar_lea.sflag [#allocation3], %s375
          %s377 = sand.u32 %s154, 1
          %s378 = smul.addr %s377, 8
          %s379 = scalar_lea.vmem [#allocation2], %s378
          %380 = dma.done %s376, 128
        $region52: #{tpu_custom_call.1} parent=47 // pred_fallthru
          _
      $region48: #{tpu_custom_call.1} parent=5 // pred_fallthru
        _
    $region6: #{tpu_custom_call.1} parent=1 // loop_footer
      %s18 = sadd.s32 1, %s14
    $region7: #{tpu_custom_call.1} parent=1 // loop_footer_branch
      %13 = sbr.rel target = $region3
    $region8: #{tpu_custom_call.1} parent=1 // loop_exit
      _
    %381 = vsyncpa [#allocation3], 1
    %s382 = scalar_lea.sflag [#allocation3], 1
    %383 = vsyncpa %s382, 1

</llo_original>
